<compile_context>
chip_gen: v6e
topology: v6e:2x2x1
jax: 0.10.0
libtpu: 0.0.40
codegen_flags: <defaults>
</compile_context>

<pallas_src>
import jax
import jax.numpy as jnp
from jax.experimental import pallas as pl
from jax.experimental.pallas import tpu as pltpu


_SELU_ALPHA = 1.6732632423543772848170429916717
_SELU_SCALE = 1.0507009873554804934193349852946
_LANE = 128


def _round_up(n, m):
    return ((n + m - 1) // m) * m


def _selu(x):
    # exp() lowers to the EUP (its own VLIW slot); select is a cheap VPU op.
    # The exp argument is clamped to <= 0 so the untaken branch never
    # produces inf (future-proofs against expm1/multiply reformulations).
    return _SELU_SCALE * jnp.where(
        x > 0.0, x, _SELU_ALPHA * (jnp.exp(jnp.minimum(x, 0.0)) - 1.0))


# ---------------------------------------------------------------------------
# Pallas kernel: one batch tile through the full 5-layer MLP
# ---------------------------------------------------------------------------
def _decoder_kernel(z_ref,
                    w1_ref, b1_ref,
                    w2_ref, b2_ref,
                    w3_ref, b3_ref,
                    w4_ref, b4_ref,
                    w5_ref, b5_ref,
                    out_ref):
    def dense(h, w_ref, b_ref):
        # bf16 MXU inputs, f32 accumulate; bias add stays f32 (bias is f32).
        return jnp.dot(h.astype(jnp.bfloat16), w_ref[...],
                       preferred_element_type=jnp.float32) + b_ref[...]

    h = _selu(dense(z_ref[...], w1_ref, b1_ref))
    h = _selu(dense(h, w2_ref, b2_ref))
    h = _selu(dense(h, w3_ref, b3_ref))
    h = _selu(dense(h, w4_ref, b4_ref))

    # sigmoid(x) = 0.5*tanh(0.5*x) + 0.5.  The 0.5 input scale was folded into
    # W5/b5 at param-prep time, so here it's just tanh (EUP) + one FMA.
    o = dense(h, w5_ref, b5_ref)
    out_ref[...] = (0.5 * jnp.tanh(o) + 0.5).astype(out_ref.dtype)


# ---------------------------------------------------------------------------
# One-time parameter preparation (hoisted out of the forward path)
# ---------------------------------------------------------------------------
def prepare_params(params):
    """params = [(W1, b1), ..., (W5, b5)] with W_i shaped (in, out).

    * Pads every hidden layer's OUTPUT feature dim up to a multiple of 128
      lanes.  Exact: SELU(0)=0 and zero weight rows/cols contribute nothing.
    * Keeps the final layer at its true output width (a half-masked store is
      far cheaper than 2x output HBM traffic + a wrapper slice).
    * Casts weights to bf16 for the MXU; biases stay f32 (negligible bytes,
      exact bias add).
    * Folds the sigmoid's 0.5 input scale into W5/b5 (one-time weight
      transform, saves a per-tile VPU multiply).
    Call ONCE at init; pass the result to decoder_forward.
    """
    n = len(params)
    flat = []
    prev = params[0][0].shape[0]          # z_dim: K of matmul #1, unpadded
    for i, (w, b) in enumerate(params):
        out_dim = w.shape[1]
        last = i == n - 1
        out_p = out_dim if last else _round_up(out_dim, _LANE)
        wp = jnp.zeros((prev, out_p), jnp.float32).at[:w.shape[0], :out_dim].set(w)
        bp = jnp.zeros((1, out_p), jnp.float32).at[:, :out_dim].set(
            jnp.reshape(b, (1, -1)))
        if last:                          # fold sigmoid's 0.5 input scale
            wp = wp * 0.5
            bp = bp * 0.5
        flat.append(wp.astype(jnp.bfloat16))   # MXU input dtype
        flat.append(bp)                        # bias stays f32
        prev = out_p
    return flat


# ---------------------------------------------------------------------------
# Forward wrapper
# ---------------------------------------------------------------------------
def decoder_forward(z, flat_params, *, tm=2048):
    """z: (batch, z_dim) f32.  flat_params: output of prepare_params()."""
    batch, z_dim = z.shape
    x_dim = flat_params[-1].shape[1]      # final bias width = true X_dim

    # Pad rows only to a multiple of 8 (sublane) so the z block read is clean
    # for small batches; a ragged last tile (batch not multiple of tile_m) is
    # handled by pl.cdiv + Pallas masked output writeback.
    batch_pad = _round_up(batch, 8)
    if batch_pad != batch:
        z = jnp.pad(z, ((0, batch_pad - batch), (0, 0)))
    tile_m = min(tm, batch_pad)
    grid = (pl.cdiv(batch_pad, tile_m),)
    # NOTE(v7x): for full megacore use, prefer batch sizes giving >= 2 tiles.

    z_spec = pl.BlockSpec((tile_m, z_dim), lambda i: (i, 0))
    out_spec = pl.BlockSpec((tile_m, x_dim), lambda i: (i, 0))
    # Constant index_map -> each weight/bias fetched once, VMEM-resident
    # across all grid steps (whole set is ~0.2 MiB).
    w_specs = [pl.BlockSpec(a.shape, lambda i: (0, 0)) for a in flat_params]

    # Advisory cost estimate using the padded dims actually computed on.
    n_layers = len(flat_params) // 2
    dims = [z_dim] + [flat_params[2 * k].shape[1] for k in range(n_layers)]
    flops = 2 * batch_pad * sum(dims[k] * dims[k + 1] for k in range(n_layers))
    transcendentals = batch_pad * sum(dims[1:])
    bytes_accessed = int(
        z.size * z.dtype.itemsize
        + batch * x_dim * 4
        + sum(a.size * a.dtype.itemsize for a in flat_params))

    return pl.pallas_call(
        _decoder_kernel,
        out_shape=jax.ShapeDtypeStruct((batch, x_dim), jnp.float32),
        grid=grid,
        in_specs=[z_spec] + w_specs,
        out_specs=out_spec,
        compiler_params=pltpu.CompilerParams(
            dimension_semantics=("parallel",)),    # megacore split on v7x
        cost_estimate=pl.CostEstimate(
            flops=int(flops),
            transcendentals=int(transcendentals),
            bytes_accessed=bytes_accessed),
    )(z, *flat_params)


# ---------------------------------------------------------------------------
# Deterministic parameter construction + pure-JAX reference
# ---------------------------------------------------------------------------
def make_params(key, z_dim, h_dim, x_dim):
    dims = [z_dim, h_dim // 4, h_dim // 2, h_dim, x_dim, x_dim]
    params = []
    for i in range(5):
        key, kw, kb = jax.random.split(key, 3)
        fan_in, fan_out = dims[i], dims[i + 1]
        bound = 1.0 / jnp.sqrt(fan_in)
        # stored as (in, out): PyTorch's (out, in) weight, pre-transposed
        w = jax.random.uniform(kw, (fan_in, fan_out), jnp.float32, -bound, bound)
        b = jax.random.uniform(kb, (1, fan_out), jnp.float32, -bound, bound)
        params.append((w, b))
    return params


def decoder_ref(z, params):
    """Pure-JAX f32 reference (Dropout(p=0.0) is the identity and is omitted)."""
    h = z
    for i, (w, b) in enumerate(params):
        h = h @ w + b
        h = jax.nn.selu(h) if i < 4 else jax.nn.sigmoid(h)
    return h


if __name__ == "__main__":
    Z_DIM, H_DIM, X_DIM = 8, 32, 64
    BATCH = 2

    key = jax.random.PRNGKey(0)
    key, kz = jax.random.split(key)
    z = jax.random.normal(kz, (BATCH, Z_DIM), dtype=jnp.float32)
    params = make_params(key, Z_DIM, H_DIM, X_DIM)

    flat = prepare_params(params)          # one-time: pad + bf16 + 0.5 fold
    out = decoder_forward(z, flat)
    out = jax.block_until_ready(out)

    ref = decoder_ref(z, params)
    assert out.shape == (BATCH, X_DIM)
    # bf16 MXU inputs with f32 accumulation: compare against the f32 reference
    # at a bf16-appropriate tolerance.
    err = float(jnp.max(jnp.abs(out - ref)))
    assert jnp.allclose(out, ref, atol=2e-2, rtol=2e-2), err

    print("KERNEL_OK")
</pallas_src>

<mosaic_0001>
module attributes {stable_mosaic.version = 11 : i64} {
  func.func @_decoder_kernel(%arg0: i32, %arg1: memref<8x8xf32, #tpu.memory_space<vmem>>, %arg2: memref<8x128xbf16, #tpu.memory_space<vmem>>, %arg3: memref<1x128xf32, #tpu.memory_space<vmem>>, %arg4: memref<128x128xbf16, #tpu.memory_space<vmem>>, %arg5: memref<1x128xf32, #tpu.memory_space<vmem>>, %arg6: memref<128x128xbf16, #tpu.memory_space<vmem>>, %arg7: memref<1x128xf32, #tpu.memory_space<vmem>>, %arg8: memref<128x128xbf16, #tpu.memory_space<vmem>>, %arg9: memref<1x128xf32, #tpu.memory_space<vmem>>, %arg10: memref<128x64xbf16, #tpu.memory_space<vmem>>, %arg11: memref<1x64xf32, #tpu.memory_space<vmem>>, %arg12: memref<8x64xf32, #tpu.memory_space<vmem>>) attributes {dimension_semantics = [#tpu.dimension_semantics<parallel>], iteration_bounds = array<i64: 1>, scalar_prefetch = 0 : i64, scratch_operands = 0 : i64, tpu.core_type = #tpu.core_type<tc>, window_params = [{transform_indices = @transform_0, window_bounds = array<i64: 8, 8>}, {pipeline_mode = #tpu.pipeline_mode<synchronous>, transform_indices = @transform_1, window_bounds = array<i64: 8, 128>}, {pipeline_mode = #tpu.pipeline_mode<synchronous>, transform_indices = @transform_2, window_bounds = array<i64: 1, 128>}, {pipeline_mode = #tpu.pipeline_mode<synchronous>, transform_indices = @transform_3, window_bounds = array<i64: 128, 128>}, {pipeline_mode = #tpu.pipeline_mode<synchronous>, transform_indices = @transform_4, window_bounds = array<i64: 1, 128>}, {pipeline_mode = #tpu.pipeline_mode<synchronous>, transform_indices = @transform_5, window_bounds = array<i64: 128, 128>}, {pipeline_mode = #tpu.pipeline_mode<synchronous>, transform_indices = @transform_6, window_bounds = array<i64: 1, 128>}, {pipeline_mode = #tpu.pipeline_mode<synchronous>, transform_indices = @transform_7, window_bounds = array<i64: 128, 128>}, {pipeline_mode = #tpu.pipeline_mode<synchronous>, transform_indices = @transform_8, window_bounds = array<i64: 1, 128>}, {pipeline_mode = #tpu.pipeline_mode<synchronous>, transform_indices = @transform_9, window_bounds = array<i64: 128, 64>}, {pipeline_mode = #tpu.pipeline_mode<synchronous>, transform_indices = @transform_10, window_bounds = array<i64: 1, 64>}, {transform_indices = @transform_11, window_bounds = array<i64: 8, 64>}]} {
    %c0 = arith.constant 0 : index
    %c0_0 = arith.constant 0 : index
    %0 = vector.load %arg1[%c0, %c0_0] : memref<8x8xf32, #tpu.memory_space<vmem>>, vector<8x8xf32>
    %1 = arith.truncf %0 : vector<8x8xf32> to vector<8x8xbf16>
    %c0_1 = arith.constant 0 : index
    %c0_2 = arith.constant 0 : index
    %2 = vector.load %arg2[%c0_1, %c0_2] : memref<8x128xbf16, #tpu.memory_space<vmem>>, vector<8x128xbf16>
    %cst = arith.constant dense<0.000000e+00> : vector<8x128xf32>
    %3 = tpu.matmul %1, %2, %cst {dimension_numbers = #tpu.dot_dimension_numbers<[1], [0], [0], [1], [0, 0, 1, 1], [], []>} : vector<8x8xbf16>, vector<8x128xbf16>, vector<8x128xf32> -> vector<8x128xf32>
    %c0_3 = arith.constant 0 : index
    %c0_4 = arith.constant 0 : index
    %4 = vector.load %arg3[%c0_3, %c0_4] : memref<1x128xf32, #tpu.memory_space<vmem>>, vector<1x128xf32>
    %5 = vector.broadcast %4 : vector<1x128xf32> to vector<8x128xf32>
    %6 = arith.addf %3, %5 : vector<8x128xf32>
    %cst_5 = arith.constant 0.000000e+00 : f32
    %7 = vector.broadcast %cst_5 : f32 to vector<8x128xf32>
    %8 = arith.cmpf ogt, %6, %7 : vector<8x128xf32>
    %cst_6 = arith.constant 0.000000e+00 : f32
    %9 = vector.broadcast %cst_6 : f32 to vector<8x128xf32>
    %10 = arith.minimumf %6, %9 : vector<8x128xf32>
    %11 = math.exp %10 : vector<8x128xf32>
    %cst_7 = arith.constant 1.000000e+00 : f32
    %12 = vector.broadcast %cst_7 : f32 to vector<8x128xf32>
    %13 = arith.subf %11, %12 : vector<8x128xf32>
    %cst_8 = arith.constant 1.67326319 : f32
    %14 = vector.broadcast %cst_8 : f32 to vector<8x128xf32>
    %15 = arith.mulf %14, %13 : vector<8x128xf32>
    %16 = arith.select %8, %6, %15 : vector<8x128xi1>, vector<8x128xf32>
    %cst_9 = arith.constant 1.05070102 : f32
    %17 = vector.broadcast %cst_9 : f32 to vector<8x128xf32>
    %18 = arith.mulf %17, %16 : vector<8x128xf32>
    %19 = arith.truncf %18 : vector<8x128xf32> to vector<8x128xbf16>
    %c0_10 = arith.constant 0 : index
    %c0_11 = arith.constant 0 : index
    %20 = vector.load %arg4[%c0_10, %c0_11] : memref<128x128xbf16, #tpu.memory_space<vmem>>, vector<128x128xbf16>
    %cst_12 = arith.constant dense<0.000000e+00> : vector<8x128xf32>
    %21 = tpu.matmul %19, %20, %cst_12 {dimension_numbers = #tpu.dot_dimension_numbers<[1], [0], [0], [1], [0, 0, 1, 1], [], []>} : vector<8x128xbf16>, vector<128x128xbf16>, vector<8x128xf32> -> vector<8x128xf32>
    %c0_13 = arith.constant 0 : index
    %c0_14 = arith.constant 0 : index
    %22 = vector.load %arg5[%c0_13, %c0_14] : memref<1x128xf32, #tpu.memory_space<vmem>>, vector<1x128xf32>
    %23 = vector.broadcast %22 : vector<1x128xf32> to vector<8x128xf32>
    %24 = arith.addf %21, %23 : vector<8x128xf32>
    %cst_15 = arith.constant 0.000000e+00 : f32
    %25 = vector.broadcast %cst_15 : f32 to vector<8x128xf32>
    %26 = arith.cmpf ogt, %24, %25 : vector<8x128xf32>
    %cst_16 = arith.constant 0.000000e+00 : f32
    %27 = vector.broadcast %cst_16 : f32 to vector<8x128xf32>
    %28 = arith.minimumf %24, %27 : vector<8x128xf32>
    %29 = math.exp %28 : vector<8x128xf32>
    %cst_17 = arith.constant 1.000000e+00 : f32
    %30 = vector.broadcast %cst_17 : f32 to vector<8x128xf32>
    %31 = arith.subf %29, %30 : vector<8x128xf32>
    %cst_18 = arith.constant 1.67326319 : f32
    %32 = vector.broadcast %cst_18 : f32 to vector<8x128xf32>
    %33 = arith.mulf %32, %31 : vector<8x128xf32>
    %34 = arith.select %26, %24, %33 : vector<8x128xi1>, vector<8x128xf32>
    %cst_19 = arith.constant 1.05070102 : f32
    %35 = vector.broadcast %cst_19 : f32 to vector<8x128xf32>
    %36 = arith.mulf %35, %34 : vector<8x128xf32>
    %37 = arith.truncf %36 : vector<8x128xf32> to vector<8x128xbf16>
    %c0_20 = arith.constant 0 : index
    %c0_21 = arith.constant 0 : index
    %38 = vector.load %arg6[%c0_20, %c0_21] : memref<128x128xbf16, #tpu.memory_space<vmem>>, vector<128x128xbf16>
    %cst_22 = arith.constant dense<0.000000e+00> : vector<8x128xf32>
    %39 = tpu.matmul %37, %38, %cst_22 {dimension_numbers = #tpu.dot_dimension_numbers<[1], [0], [0], [1], [0, 0, 1, 1], [], []>} : vector<8x128xbf16>, vector<128x128xbf16>, vector<8x128xf32> -> vector<8x128xf32>
    %c0_23 = arith.constant 0 : index
    %c0_24 = arith.constant 0 : index
    %40 = vector.load %arg7[%c0_23, %c0_24] : memref<1x128xf32, #tpu.memory_space<vmem>>, vector<1x128xf32>
    %41 = vector.broadcast %40 : vector<1x128xf32> to vector<8x128xf32>
    %42 = arith.addf %39, %41 : vector<8x128xf32>
    %cst_25 = arith.constant 0.000000e+00 : f32
    %43 = vector.broadcast %cst_25 : f32 to vector<8x128xf32>
    %44 = arith.cmpf ogt, %42, %43 : vector<8x128xf32>
    %cst_26 = arith.constant 0.000000e+00 : f32
    %45 = vector.broadcast %cst_26 : f32 to vector<8x128xf32>
    %46 = arith.minimumf %42, %45 : vector<8x128xf32>
    %47 = math.exp %46 : vector<8x128xf32>
    %cst_27 = arith.constant 1.000000e+00 : f32
    %48 = vector.broadcast %cst_27 : f32 to vector<8x128xf32>
    %49 = arith.subf %47, %48 : vector<8x128xf32>
    %cst_28 = arith.constant 1.67326319 : f32
    %50 = vector.broadcast %cst_28 : f32 to vector<8x128xf32>
    %51 = arith.mulf %50, %49 : vector<8x128xf32>
    %52 = arith.select %44, %42, %51 : vector<8x128xi1>, vector<8x128xf32>
    %cst_29 = arith.constant 1.05070102 : f32
    %53 = vector.broadcast %cst_29 : f32 to vector<8x128xf32>
    %54 = arith.mulf %53, %52 : vector<8x128xf32>
    %55 = arith.truncf %54 : vector<8x128xf32> to vector<8x128xbf16>
    %c0_30 = arith.constant 0 : index
    %c0_31 = arith.constant 0 : index
    %56 = vector.load %arg8[%c0_30, %c0_31] : memref<128x128xbf16, #tpu.memory_space<vmem>>, vector<128x128xbf16>
    %cst_32 = arith.constant dense<0.000000e+00> : vector<8x128xf32>
    %57 = tpu.matmul %55, %56, %cst_32 {dimension_numbers = #tpu.dot_dimension_numbers<[1], [0], [0], [1], [0, 0, 1, 1], [], []>} : vector<8x128xbf16>, vector<128x128xbf16>, vector<8x128xf32> -> vector<8x128xf32>
    %c0_33 = arith.constant 0 : index
    %c0_34 = arith.constant 0 : index
    %58 = vector.load %arg9[%c0_33, %c0_34] : memref<1x128xf32, #tpu.memory_space<vmem>>, vector<1x128xf32>
    %59 = vector.broadcast %58 : vector<1x128xf32> to vector<8x128xf32>
    %60 = arith.addf %57, %59 : vector<8x128xf32>
    %cst_35 = arith.constant 0.000000e+00 : f32
    %61 = vector.broadcast %cst_35 : f32 to vector<8x128xf32>
    %62 = arith.cmpf ogt, %60, %61 : vector<8x128xf32>
    %cst_36 = arith.constant 0.000000e+00 : f32
    %63 = vector.broadcast %cst_36 : f32 to vector<8x128xf32>
    %64 = arith.minimumf %60, %63 : vector<8x128xf32>
    %65 = math.exp %64 : vector<8x128xf32>
    %cst_37 = arith.constant 1.000000e+00 : f32
    %66 = vector.broadcast %cst_37 : f32 to vector<8x128xf32>
    %67 = arith.subf %65, %66 : vector<8x128xf32>
    %cst_38 = arith.constant 1.67326319 : f32
    %68 = vector.broadcast %cst_38 : f32 to vector<8x128xf32>
    %69 = arith.mulf %68, %67 : vector<8x128xf32>
    %70 = arith.select %62, %60, %69 : vector<8x128xi1>, vector<8x128xf32>
    %cst_39 = arith.constant 1.05070102 : f32
    %71 = vector.broadcast %cst_39 : f32 to vector<8x128xf32>
    %72 = arith.mulf %71, %70 : vector<8x128xf32>
    %73 = arith.truncf %72 : vector<8x128xf32> to vector<8x128xbf16>
    %c0_40 = arith.constant 0 : index
    %c0_41 = arith.constant 0 : index
    %74 = vector.load %arg10[%c0_40, %c0_41] : memref<128x64xbf16, #tpu.memory_space<vmem>>, vector<128x64xbf16>
    %cst_42 = arith.constant dense<0.000000e+00> : vector<8x64xf32>
    %75 = tpu.matmul %73, %74, %cst_42 {dimension_numbers = #tpu.dot_dimension_numbers<[1], [0], [0], [1], [0, 0, 1, 1], [], []>} : vector<8x128xbf16>, vector<128x64xbf16>, vector<8x64xf32> -> vector<8x64xf32>
    %c0_43 = arith.constant 0 : index
    %c0_44 = arith.constant 0 : index
    %76 = vector.load %arg11[%c0_43, %c0_44] : memref<1x64xf32, #tpu.memory_space<vmem>>, vector<1x64xf32>
    %77 = vector.broadcast %76 : vector<1x64xf32> to vector<8x64xf32>
    %78 = arith.addf %75, %77 : vector<8x64xf32>
    %79 = math.tanh %78 : vector<8x64xf32>
    %cst_45 = arith.constant 5.000000e-01 : f32
    %80 = vector.broadcast %cst_45 : f32 to vector<8x64xf32>
    %81 = arith.mulf %80, %79 : vector<8x64xf32>
    %cst_46 = arith.constant 5.000000e-01 : f32
    %82 = vector.broadcast %cst_46 : f32 to vector<8x64xf32>
    %83 = arith.addf %81, %82 : vector<8x64xf32>
    %c0_47 = arith.constant 0 : index
    %c0_48 = arith.constant 0 : index
    %84 = vector.load %arg12[%c0_47, %c0_48] : memref<8x64xf32, #tpu.memory_space<vmem>>, vector<8x64xf32>
    tpu.vector_store %arg12[%c0_47, %c0_48], %83 {strides = array<i32>} : memref<8x64xf32, #tpu.memory_space<vmem>>, vector<8x64xf32>,
    return
  }
  func.func @transform_0(%arg0: i32) -> (i32, i32) {
    %c0_i32 = arith.constant 0 : i32
    %c0_i32_0 = arith.constant 0 : i32
    return %arg0, %c0_i32 : i32, i32
  }
  func.func @transform_1(%arg0: i32) -> (i32, i32) {
    %c0_i32 = arith.constant 0 : i32
    %c0_i32_0 = arith.constant 0 : i32
    %c0_i32_1 = arith.constant 0 : i32
    return %c0_i32, %c0_i32_0 : i32, i32
  }
  func.func @transform_2(%arg0: i32) -> (i32, i32) {
    %c0_i32 = arith.constant 0 : i32
    %c0_i32_0 = arith.constant 0 : i32
    %c0_i32_1 = arith.constant 0 : i32
    return %c0_i32, %c0_i32_0 : i32, i32
  }
  func.func @transform_3(%arg0: i32) -> (i32, i32) {
    %c0_i32 = arith.constant 0 : i32
    %c0_i32_0 = arith.constant 0 : i32
    %c0_i32_1 = arith.constant 0 : i32
    return %c0_i32, %c0_i32_0 : i32, i32
  }
  func.func @transform_4(%arg0: i32) -> (i32, i32) {
    %c0_i32 = arith.constant 0 : i32
    %c0_i32_0 = arith.constant 0 : i32
    %c0_i32_1 = arith.constant 0 : i32
    return %c0_i32, %c0_i32_0 : i32, i32
  }
  func.func @transform_5(%arg0: i32) -> (i32, i32) {
    %c0_i32 = arith.constant 0 : i32
    %c0_i32_0 = arith.constant 0 : i32
    %c0_i32_1 = arith.constant 0 : i32
    return %c0_i32, %c0_i32_0 : i32, i32
  }
  func.func @transform_6(%arg0: i32) -> (i32, i32) {
    %c0_i32 = arith.constant 0 : i32
    %c0_i32_0 = arith.constant 0 : i32
    %c0_i32_1 = arith.constant 0 : i32
    return %c0_i32, %c0_i32_0 : i32, i32
  }
  func.func @transform_7(%arg0: i32) -> (i32, i32) {
    %c0_i32 = arith.constant 0 : i32
    %c0_i32_0 = arith.constant 0 : i32
    %c0_i32_1 = arith.constant 0 : i32
    return %c0_i32, %c0_i32_0 : i32, i32
  }
  func.func @transform_8(%arg0: i32) -> (i32, i32) {
    %c0_i32 = arith.constant 0 : i32
    %c0_i32_0 = arith.constant 0 : i32
    %c0_i32_1 = arith.constant 0 : i32
    return %c0_i32, %c0_i32_0 : i32, i32
  }
  func.func @transform_9(%arg0: i32) -> (i32, i32) {
    %c0_i32 = arith.constant 0 : i32
    %c0_i32_0 = arith.constant 0 : i32
    %c0_i32_1 = arith.constant 0 : i32
    return %c0_i32, %c0_i32_0 : i32, i32
  }
  func.func @transform_10(%arg0: i32) -> (i32, i32) {
    %c0_i32 = arith.constant 0 : i32
    %c0_i32_0 = arith.constant 0 : i32
    %c0_i32_1 = arith.constant 0 : i32
    return %c0_i32, %c0_i32_0 : i32, i32
  }
  func.func @transform_11(%arg0: i32) -> (i32, i32) {
    %c0_i32 = arith.constant 0 : i32
    %c0_i32_0 = arith.constant 0 : i32
    return %arg0, %c0_i32 : i32, i32
  }
}

</mosaic_0001>

<llo_original>
// kernel: tpu_custom_call.1
$region0: #{tpu_custom_call.1}
  #allocation0 [shape = 'u32[]', space=smem, size = 0x4, offset = 0x4, fixed_abs, tag = 'smem constant byte address 0x4 - core index']
  #allocation1 [shape = 'u32[144,128]{1,0:T(1,128)}', space=vmem, size = 0x12000, scoped, tag = 'internal scratch']
  %s0 = inlined_call_operand.vmem [shape: f32[8,8], index: 0, kind: input, shape index: {}]
  %s1 = inlined_call_operand.vmem [shape: bf16[8,128], index: 1, kind: input, shape index: {}]
  %s2 = inlined_call_operand.vmem [shape: f32[1,128], index: 2, kind: input, shape index: {}]
  %s3 = inlined_call_operand.vmem [shape: bf16[128,128], index: 3, kind: input, shape index: {}]
  %s4 = inlined_call_operand.vmem [shape: f32[1,128], index: 4, kind: input, shape index: {}]
  %s5 = inlined_call_operand.hbm [shape: bf16[128,128], index: 5, kind: input, shape index: {}]
  %s6 = inlined_call_operand.vmem [shape: f32[1,128], index: 6, kind: input, shape index: {}]
  %s7 = inlined_call_operand.hbm [shape: bf16[128,128], index: 7, kind: input, shape index: {}]
  %s8 = inlined_call_operand.vmem [shape: f32[1,128], index: 8, kind: input, shape index: {}]
  %s9 = inlined_call_operand.vmem [shape: bf16[128,64], index: 9, kind: input, shape index: {}]
  %s10 = inlined_call_operand.vmem [shape: f32[1,64], index: 10, kind: input, shape index: {}]
  %s11 = inlined_call_operand.hbm [shape: f32[2,64], index: 11, kind: output, shape index: {}]
  %s12 = sld [smem:[#allocation0]]
  $region62: #{tpu_custom_call.1} parent=0
    _
  %s14 = ssub.s32 1, %s12
  %s15 = scalar_select 0, %s14, %s12
  $region1: #{tpu_custom_call.1} parent=0
    #allocation2 [shape = 'u8[32768]{0}', space=vmem, size = 0x8000, scoped, tag = 'input window, operand 5, single buffered']
    #allocation3 [shape = 's32[1]{0}', space=sflag, size = 0x4, scoped, tag = 'scoped memory for tpu_custom_call.1']
    #allocation4 [shape = 's32[1]{0}', space=sflag, size = 0x4, scoped, tag = 'scoped memory for tpu_custom_call.1']
    #allocation5 [shape = 'u8[32768]{0}', space=vmem, size = 0x8000, scoped, tag = 'input window, operand 7, single buffered']
    #allocation6 [shape = 's32[1]{0}', space=sflag, size = 0x4, scoped, tag = 'scoped memory for tpu_custom_call.1']
    #allocation7 [shape = 'u8[4096]{0}', space=vmem, size = 0x1000, scoped, tag = 'output window, operand 0, single buffered']
    %16 = vsyncpa [#allocation3], 0
    %17 = vsyncpa [#allocation6], 0
    %18 = vsyncpa [#allocation4], 0
    // Predicated region
    $region2: #{tpu_custom_call.1} parent=1 // pred_check
      _
    $region3: #{tpu_custom_call.1} parent=1 // pred_check_branch
      %20 = sbr.rel (0) target = $region5
    $region4: #{tpu_custom_call.1} parent=1 // pred_region
      _
    $region5: #{tpu_custom_call.1} parent=1 // pred_fallthru
      _
    // Predicated region
    $region6: #{tpu_custom_call.1} parent=1 // pred_check
      _
    $region7: #{tpu_custom_call.1} parent=1 // pred_check_branch
      %22 = sbr.rel (0) target = $region9
    $region8: #{tpu_custom_call.1} parent=1 // pred_region
      _
    $region9: #{tpu_custom_call.1} parent=1 // pred_fallthru
      _
    // Predicated region
    $region10: #{tpu_custom_call.1} parent=1 // pred_check
      _
    $region11: #{tpu_custom_call.1} parent=1 // pred_check_branch
      %24 = sbr.rel (0) target = $region13
    $region12: #{tpu_custom_call.1} parent=1 // pred_region
      _
    $region13: #{tpu_custom_call.1} parent=1 // pred_fallthru
      _
    // Predicated region
    $region14: #{tpu_custom_call.1} parent=1 // pred_check
      _
    $region15: #{tpu_custom_call.1} parent=1 // pred_check_branch
      %26 = sbr.rel (0) target = $region17
    $region16: #{tpu_custom_call.1} parent=1 // pred_region
      _
    $region17: #{tpu_custom_call.1} parent=1 // pred_fallthru
      _
    // Predicated region
    $region18: #{tpu_custom_call.1} parent=1 // pred_check
      _
    $region19: #{tpu_custom_call.1} parent=1 // pred_check_branch
      %28 = sbr.rel (0) target = $region21
    $region20: #{tpu_custom_call.1} parent=1 // pred_region
      _
    $region21: #{tpu_custom_call.1} parent=1 // pred_fallthru
      _
    // Predicated region
    $region22: #{tpu_custom_call.1} parent=1 // pred_check
      _
    $region23: #{tpu_custom_call.1} parent=1 // pred_check_branch
      %30 = sbr.rel (0) target = $region25
    $region24: #{tpu_custom_call.1} parent=1 // pred_region
      %s32 = ssub.s32 1024, 1024
      %33 = vsyncadd [#allocation3], %s32
      %s34 = sshll.u32 [#allocation2], 4
      %s35 = int_to_ptr.vmem [resolvable:$true] %s34
      %40 = dma.hbm_to_vmem [thread:$0]  %s5, 1024, %s35, [#allocation3], 64, 64, 4
    $region25: #{tpu_custom_call.1} parent=1 // pred_fallthru
      _
    // Predicated region
    $region26: #{tpu_custom_call.1} parent=1 // pred_check
      _
    $region27: #{tpu_custom_call.1} parent=1 // pred_check_branch
      %42 = sbr.rel (0) target = $region29
    $region28: #{tpu_custom_call.1} parent=1 // pred_region
      _
    $region29: #{tpu_custom_call.1} parent=1 // pred_fallthru
      _
    // Predicated region
    $region30: #{tpu_custom_call.1} parent=1 // pred_check
      _
    $region31: #{tpu_custom_call.1} parent=1 // pred_check_branch
      %44 = sbr.rel (0) target = $region33
    $region32: #{tpu_custom_call.1} parent=1 // pred_region
      %s46 = ssub.s32 1024, 1024
      %47 = vsyncadd [#allocation6], %s46
      %s48 = sshll.u32 [#allocation5], 4
      %s49 = int_to_ptr.vmem [resolvable:$true] %s48
      %54 = dma.hbm_to_vmem [thread:$0]  %s7, 1024, %s49, [#allocation6], 64, 64, 4
    $region33: #{tpu_custom_call.1} parent=1 // pred_fallthru
      _
    // Predicated region
    $region34: #{tpu_custom_call.1} parent=1 // pred_check
      _
    $region35: #{tpu_custom_call.1} parent=1 // pred_check_branch
      %56 = sbr.rel (0) target = $region37
    $region36: #{tpu_custom_call.1} parent=1 // pred_region
      _
    $region37: #{tpu_custom_call.1} parent=1 // pred_fallthru
      _
    // Predicated region
    $region38: #{tpu_custom_call.1} parent=1 // pred_check
      _
    $region39: #{tpu_custom_call.1} parent=1 // pred_check_branch
      %58 = sbr.rel (0) target = $region41
    $region40: #{tpu_custom_call.1} parent=1 // pred_region
      _
    $region41: #{tpu_custom_call.1} parent=1 // pred_fallthru
      _
    // Predicated region
    $region42: #{tpu_custom_call.1} parent=1 // pred_check
      _
    $region43: #{tpu_custom_call.1} parent=1 // pred_check_branch
      %60 = sbr.rel (0) target = $region45
    $region44: #{tpu_custom_call.1} parent=1 // pred_region
      _
    $region45: #{tpu_custom_call.1} parent=1 // pred_fallthru
      _
    // Predicated region
    $region46: #{tpu_custom_call.1} parent=1 // pred_check
      _
    $region47: #{tpu_custom_call.1} parent=1 // pred_check_branch
      %62 = sbr.rel (0) target = $region49
    $region48: #{tpu_custom_call.1} parent=1 // pred_region
      %63 = dma.done [#allocation3], 1024
    $region49: #{tpu_custom_call.1} parent=1 // pred_fallthru
      _
    // Predicated region
    $region50: #{tpu_custom_call.1} parent=1 // pred_check
      _
    $region51: #{tpu_custom_call.1} parent=1 // pred_check_branch
      %65 = sbr.rel (0) target = $region53
    $region52: #{tpu_custom_call.1} parent=1 // pred_region
      %66 = dma.done [#allocation6], 1024
    $region53: #{tpu_custom_call.1} parent=1 // pred_fallthru
      _
    %v68 = vld [vmem:[%s0] sm:$0xff]
    %v69 = vpack.c.bf16 %v68, %v68
    %v70 = vld [vmem:[%s1] sm:$0xf]
    %v71 = vld [vmem:[%s2] sm:$0x1]
    %v73 = vlaneseq
    %v74 = vshrl.u32 %v73, 7
    %v75 = vsub.s32 0, %v74
    %v76 = vrot.slane %v71, %v75
    %vm78 = vcmask 64512
    %v80 = vsel %vm78, %v69, 0
    %vm82 = vcmask 1043456
    %v84 = vsel %vm82, %v70, 0
    %86 = vmatprep.subr.bf16.mxu0 0
    %87 = vmatpush1.bf16.msra.mxu0 0
    %88 = vmatprep.subr.bf16.mxu0 0
    %89 = vmatpush1.bf16.msra.mxu0 0
    %90 = vmatprep.subr.bf16.mxu0 0
    %91 = vmatpush1.bf16.msra.mxu0 0
    %92 = vmatprep.subr.bf16.mxu0 0
    %93 = vmatpush1.bf16.msra.mxu0 0
    %94 = vmatprep.subr.bf16.mxu0 0
    %95 = vmatpush1.bf16.msra.mxu0 0
    %96 = vmatprep.subr.bf16.mxu0 0
    %97 = vmatpush1.bf16.msra.mxu0 0
    %98 = vmatprep.subr.bf16.mxu0 0
    %99 = vmatpush1.bf16.msra.mxu0 0
    %100 = vmatprep.subr.bf16.mxu0 0
    %101 = vmatpush1.bf16.msra.mxu0 %v84
    %102 = vmatprep.subr.bf16.mxu0 0
    %103 = vmatpush2.bf16.msra.mxu0 0
    %104 = vmatprep.subr.bf16.mxu0 0
    %105 = vmatpush2.bf16.msra.mxu0 0
    %106 = vmatprep.subr.bf16.mxu0 0
    %107 = vmatpush2.bf16.msra.mxu0 0
    %108 = vmatprep.subr.bf16.mxu0 0
    %109 = vmatpush2.bf16.msra.mxu0 0
    %110 = vmatprep.subr.bf16.mxu0 0
    %111 = vmatpush2.bf16.msra.mxu0 0
    %112 = vmatprep.subr.bf16.mxu0 0
    %113 = vmatpush2.bf16.msra.mxu0 0
    %114 = vmatprep.subr.bf16.mxu0 0
    %115 = vmatpush2.bf16.msra.mxu0 0
    %116 = vmatprep.subr.bf16.mxu0 0
    %117 = vmatpush2.bf16.msra.mxu0 0
    %118 = vmatprep.mubr.bf16.mxu0 0
    %119 = vmatmul.mubr.bf16.gmra.mxu0 %v80
    %v120 = vpop.f32.mrf.mxu0
    %v121 = vadd.f32 %v76, %v120
    %v122 = vpop.f32.mrf.mxu0
    %v123 = vpop.f32.mrf.mxu0
    %v124 = vpop.f32.mrf.mxu0
    %125 = vdwg.mxu0
    %vm126 = vcmp.gt.f32.partialorder %v121, 0.0
    %v127 = vmin.f32 %v121, 0.0
    %v128 = vmul.f32 %v127, 1.442695
    %v129 = vpow.pop %v128
    %v130 = vsub.f32 %v129, 1.0
    %v131 = vmul.f32 %v130, 1.6732632
    %v132 = vsel %vm126, %v121, %v131
    %v133 = vmul.f32 %v132, 1.050701
    %v134 = vpack.c.bf16 %v133, %v133
    %v135 = vld [vmem:[%s3] sm:$0xf]
    %v136 = vld [vmem:[%s3 + $0x4] sm:$0xf]
    %v137 = vld [vmem:[%s3 + $0x8] sm:$0xf]
    %v138 = vld [vmem:[%s3 + $0xc] sm:$0xf]
    %v139 = vld [vmem:[%s3 + $0x10] sm:$0xf]
    %v140 = vld [vmem:[%s3 + $0x14] sm:$0xf]
    %v141 = vld [vmem:[%s3 + $0x18] sm:$0xf]
    %v142 = vld [vmem:[%s3 + $0x1c] sm:$0xf]
    %v143 = vld [vmem:[%s3 + $0x20] sm:$0xf]
    %v144 = vld [vmem:[%s3 + $0x24] sm:$0xf]
    %v145 = vld [vmem:[%s3 + $0x28] sm:$0xf]
    %v146 = vld [vmem:[%s3 + $0x2c] sm:$0xf]
    %v147 = vld [vmem:[%s3 + $0x30] sm:$0xf]
    %v148 = vld [vmem:[%s3 + $0x34] sm:$0xf]
    %v149 = vld [vmem:[%s3 + $0x38] sm:$0xf]
    %v150 = vld [vmem:[%s3 + $0x3c] sm:$0xf]
    %v151 = vld [vmem:[%s4] sm:$0x1]
    %v153 = vlaneseq
    %v154 = vshrl.u32 %v153, 7
    %v155 = vsub.s32 0, %v154
    %v156 = vrot.slane %v151, %v155
    %v174 = vunpack.c.l.b16 %v135
    %v175 = vunpack.c.l.b16 %v136
    %v176 = vunpack.c.l.b16 %v137
    %v177 = vunpack.c.l.b16 %v138
    %v178 = vunpack.c.l.b16 %v139
    %v179 = vunpack.c.l.b16 %v140
    %v180 = vunpack.c.l.b16 %v141
    %v181 = vunpack.c.l.b16 %v142
    %v182 = vunpack.c.l.b16 %v143
    %v183 = vunpack.c.l.b16 %v144
    %v184 = vunpack.c.l.b16 %v145
    %v185 = vunpack.c.l.b16 %v146
    %v186 = vunpack.c.l.b16 %v147
    %v187 = vunpack.c.l.b16 %v148
    %v188 = vunpack.c.l.b16 %v149
    %v189 = vunpack.c.l.b16 %v150
    %v190 = vpack.c.b16 %v175, %v174
    %v191 = vpack.c.b16 %v177, %v176
    %v192 = vpack.c.b16 %v179, %v178
    %v193 = vpack.c.b16 %v181, %v180
    %v194 = vpack.c.b16 %v183, %v182
    %v195 = vpack.c.b16 %v185, %v184
    %v196 = vpack.c.b16 %v187, %v186
    %v197 = vpack.c.b16 %v189, %v188
    %206 = vmatprep.subr.bf16.mxu0 0
    %207 = vmatpush1.bf16.msra.mxu0 %v197
    %208 = vmatprep.subr.bf16.mxu0 0
    %209 = vmatpush1.bf16.msra.mxu0 %v196
    %210 = vmatprep.subr.bf16.mxu0 0
    %211 = vmatpush1.bf16.msra.mxu0 %v195
    %212 = vmatprep.subr.bf16.mxu0 0
    %213 = vmatpush1.bf16.msra.mxu0 %v194
    %214 = vmatprep.subr.bf16.mxu0 0
    %215 = vmatpush1.bf16.msra.mxu0 %v193
    %216 = vmatprep.subr.bf16.mxu0 0
    %217 = vmatpush1.bf16.msra.mxu0 %v192
    %218 = vmatprep.subr.bf16.mxu0 0
    %219 = vmatpush1.bf16.msra.mxu0 %v191
    %220 = vmatprep.subr.bf16.mxu0 0
    %221 = vmatpush1.bf16.msra.mxu0 %v190
    %222 = vmatprep.subr.bf16.mxu0 0
    %223 = vmatpush2.bf16.msra.mxu0 0
    %224 = vmatprep.subr.bf16.mxu0 0
    %225 = vmatpush2.bf16.msra.mxu0 0
    %226 = vmatprep.subr.bf16.mxu0 0
    %227 = vmatpush2.bf16.msra.mxu0 0
    %228 = vmatprep.subr.bf16.mxu0 0
    %229 = vmatpush2.bf16.msra.mxu0 0
    %230 = vmatprep.subr.bf16.mxu0 0
    %231 = vmatpush2.bf16.msra.mxu0 0
    %232 = vmatprep.subr.bf16.mxu0 0
    %233 = vmatpush2.bf16.msra.mxu0 0
    %234 = vmatprep.subr.bf16.mxu0 0
    %235 = vmatpush2.bf16.msra.mxu0 0
    %236 = vmatprep.subr.bf16.mxu0 0
    %237 = vmatpush2.bf16.msra.mxu0 0
    %238 = vmatprep.mubr.bf16.mxu0 0
    %239 = vmatmul.mubr.bf16.gmra.mxu0 %v134
    %v240 = vpop.f32.mrf.mxu0
    %v241 = vadd.f32 %v156, %v240
    %v242 = vpop.f32.mrf.mxu0
    %v243 = vpop.f32.mrf.mxu0
    %v244 = vpop.f32.mrf.mxu0
    %245 = vdwg.mxu0
    %vm246 = vcmp.gt.f32.partialorder %v241, 0.0
    %v247 = vmin.f32 %v241, 0.0
    %v248 = vmul.f32 %v247, 1.442695
    %v249 = vpow.pop %v248
    %v250 = vsub.f32 %v249, 1.0
    %v251 = vmul.f32 %v250, 1.6732632
    %v252 = vsel %vm246, %v241, %v251
    %v253 = vmul.f32 %v252, 1.050701
    %v254 = vpack.c.bf16 %v253, %v253
    %v255 = vld [vmem:[#allocation2] sm:$0xf]
    %v256 = vld [vmem:[#allocation2 + $0x4] sm:$0xf]
    %v257 = vld [vmem:[#allocation2 + $0x8] sm:$0xf]
    %v258 = vld [vmem:[#allocation2 + $0xc] sm:$0xf]
    %v259 = vld [vmem:[#allocation2 + $0x10] sm:$0xf]
    %v260 = vld [vmem:[#allocation2 + $0x14] sm:$0xf]
    %v261 = vld [vmem:[#allocation2 + $0x18] sm:$0xf]
    %v262 = vld [vmem:[#allocation2 + $0x1c] sm:$0xf]
    %v263 = vld [vmem:[#allocation2 + $0x20] sm:$0xf]
    %v264 = vld [vmem:[#allocation2 + $0x24] sm:$0xf]
    %v265 = vld [vmem:[#allocation2 + $0x28] sm:$0xf]
    %v266 = vld [vmem:[#allocation2 + $0x2c] sm:$0xf]
    %v267 = vld [vmem:[#allocation2 + $0x30] sm:$0xf]
    %v268 = vld [vmem:[#allocation2 + $0x34] sm:$0xf]
    %v269 = vld [vmem:[#allocation2 + $0x38] sm:$0xf]
    %v270 = vld [vmem:[#allocation2 + $0x3c] sm:$0xf]
    %v271 = vld [vmem:[%s6] sm:$0x1]
    %v273 = vlaneseq
    %v274 = vshrl.u32 %v273, 7
    %v275 = vsub.s32 0, %v274
    %v276 = vrot.slane %v271, %v275
    %v294 = vunpack.c.l.b16 %v255
    %v295 = vunpack.c.l.b16 %v256
    %v296 = vunpack.c.l.b16 %v257
    %v297 = vunpack.c.l.b16 %v258
    %v298 = vunpack.c.l.b16 %v259
    %v299 = vunpack.c.l.b16 %v260
    %v300 = vunpack.c.l.b16 %v261
    %v301 = vunpack.c.l.b16 %v262
    %v302 = vunpack.c.l.b16 %v263
    %v303 = vunpack.c.l.b16 %v264
    %v304 = vunpack.c.l.b16 %v265
    %v305 = vunpack.c.l.b16 %v266
    %v306 = vunpack.c.l.b16 %v267
    %v307 = vunpack.c.l.b16 %v268
    %v308 = vunpack.c.l.b16 %v269
    %v309 = vunpack.c.l.b16 %v270
    %v310 = vpack.c.b16 %v295, %v294
    %v311 = vpack.c.b16 %v297, %v296
    %v312 = vpack.c.b16 %v299, %v298
    %v313 = vpack.c.b16 %v301, %v300
    %v314 = vpack.c.b16 %v303, %v302
    %v315 = vpack.c.b16 %v305, %v304
    %v316 = vpack.c.b16 %v307, %v306
    %v317 = vpack.c.b16 %v309, %v308
    %326 = vmatprep.subr.bf16.mxu0 0
    %327 = vmatpush1.bf16.msra.mxu0 %v317
    %328 = vmatprep.subr.bf16.mxu0 0
    %329 = vmatpush1.bf16.msra.mxu0 %v316
    %330 = vmatprep.subr.bf16.mxu0 0
    %331 = vmatpush1.bf16.msra.mxu0 %v315
    %332 = vmatprep.subr.bf16.mxu0 0
    %333 = vmatpush1.bf16.msra.mxu0 %v314
    %334 = vmatprep.subr.bf16.mxu0 0
    %335 = vmatpush1.bf16.msra.mxu0 %v313
    %336 = vmatprep.subr.bf16.mxu0 0
    %337 = vmatpush1.bf16.msra.mxu0 %v312
    %338 = vmatprep.subr.bf16.mxu0 0
    %339 = vmatpush1.bf16.msra.mxu0 %v311
    %340 = vmatprep.subr.bf16.mxu0 0
    %341 = vmatpush1.bf16.msra.mxu0 %v310
    %342 = vmatprep.subr.bf16.mxu0 0
    %343 = vmatpush2.bf16.msra.mxu0 0
    %344 = vmatprep.subr.bf16.mxu0 0
    %345 = vmatpush2.bf16.msra.mxu0 0
    %346 = vmatprep.subr.bf16.mxu0 0
    %347 = vmatpush2.bf16.msra.mxu0 0
    %348 = vmatprep.subr.bf16.mxu0 0
    %349 = vmatpush2.bf16.msra.mxu0 0
    %350 = vmatprep.subr.bf16.mxu0 0
    %351 = vmatpush2.bf16.msra.mxu0 0
    %352 = vmatprep.subr.bf16.mxu0 0
    %353 = vmatpush2.bf16.msra.mxu0 0
    %354 = vmatprep.subr.bf16.mxu0 0
    %355 = vmatpush2.bf16.msra.mxu0 0
    %356 = vmatprep.subr.bf16.mxu0 0
    %357 = vmatpush2.bf16.msra.mxu0 0
    %358 = vmatprep.mubr.bf16.mxu0 0
    %359 = vmatmul.mubr.bf16.gmra.mxu0 %v254
    %v360 = vpop.f32.mrf.mxu0
    %v361 = vadd.f32 %v276, %v360
    %v362 = vpop.f32.mrf.mxu0
    %v363 = vpop.f32.mrf.mxu0
    %v364 = vpop.f32.mrf.mxu0
    %365 = vdwg.mxu0
    %vm366 = vcmp.gt.f32.partialorder %v361, 0.0
    %v367 = vmin.f32 %v361, 0.0
    %v368 = vmul.f32 %v367, 1.442695
    %v369 = vpow.pop %v368
    %v370 = vsub.f32 %v369, 1.0
    %v371 = vmul.f32 %v370, 1.6732632
    %v372 = vsel %vm366, %v361, %v371
    %v373 = vmul.f32 %v372, 1.050701
    %v374 = vpack.c.bf16 %v373, %v373
    %v375 = vld [vmem:[#allocation5] sm:$0xf]
    %v376 = vld [vmem:[#allocation5 + $0x4] sm:$0xf]
    %v377 = vld [vmem:[#allocation5 + $0x8] sm:$0xf]
    %v378 = vld [vmem:[#allocation5 + $0xc] sm:$0xf]
    %v379 = vld [vmem:[#allocation5 + $0x10] sm:$0xf]
    %v380 = vld [vmem:[#allocation5 + $0x14] sm:$0xf]
    %v381 = vld [vmem:[#allocation5 + $0x18] sm:$0xf]
    %v382 = vld [vmem:[#allocation5 + $0x1c] sm:$0xf]
    %v383 = vld [vmem:[#allocation5 + $0x20] sm:$0xf]
    %v384 = vld [vmem:[#allocation5 + $0x24] sm:$0xf]
    %v385 = vld [vmem:[#allocation5 + $0x28] sm:$0xf]
    %v386 = vld [vmem:[#allocation5 + $0x2c] sm:$0xf]
    %v387 = vld [vmem:[#allocation5 + $0x30] sm:$0xf]
    %v388 = vld [vmem:[#allocation5 + $0x34] sm:$0xf]
    %v389 = vld [vmem:[#allocation5 + $0x38] sm:$0xf]
    %v390 = vld [vmem:[#allocation5 + $0x3c] sm:$0xf]
    %v391 = vld [vmem:[%s8] sm:$0x1]
    %v393 = vlaneseq
    %v394 = vshrl.u32 %v393, 7
    %v395 = vsub.s32 0, %v394
    %v396 = vrot.slane %v391, %v395
    %v414 = vunpack.c.l.b16 %v375
    %v415 = vunpack.c.l.b16 %v376
    %v416 = vunpack.c.l.b16 %v377
    %v417 = vunpack.c.l.b16 %v378
    %v418 = vunpack.c.l.b16 %v379
    %v419 = vunpack.c.l.b16 %v380
    %v420 = vunpack.c.l.b16 %v381
    %v421 = vunpack.c.l.b16 %v382
    %v422 = vunpack.c.l.b16 %v383
    %v423 = vunpack.c.l.b16 %v384
    %v424 = vunpack.c.l.b16 %v385
    %v425 = vunpack.c.l.b16 %v386
    %v426 = vunpack.c.l.b16 %v387
    %v427 = vunpack.c.l.b16 %v388
    %v428 = vunpack.c.l.b16 %v389
    %v429 = vunpack.c.l.b16 %v390
    %v430 = vpack.c.b16 %v415, %v414
    %v431 = vpack.c.b16 %v417, %v416
    %v432 = vpack.c.b16 %v419, %v418
    %v433 = vpack.c.b16 %v421, %v420
    %v434 = vpack.c.b16 %v423, %v422
    %v435 = vpack.c.b16 %v425, %v424
    %v436 = vpack.c.b16 %v427, %v426
    %v437 = vpack.c.b16 %v429, %v428
    %446 = vmatprep.subr.bf16.mxu0 0
    %447 = vmatpush1.bf16.msra.mxu0 %v437
    %448 = vmatprep.subr.bf16.mxu0 0
    %449 = vmatpush1.bf16.msra.mxu0 %v436
    %450 = vmatprep.subr.bf16.mxu0 0
    %451 = vmatpush1.bf16.msra.mxu0 %v435
    %452 = vmatprep.subr.bf16.mxu0 0
    %453 = vmatpush1.bf16.msra.mxu0 %v434
    %454 = vmatprep.subr.bf16.mxu0 0
    %455 = vmatpush1.bf16.msra.mxu0 %v433
    %456 = vmatprep.subr.bf16.mxu0 0
    %457 = vmatpush1.bf16.msra.mxu0 %v432
    %458 = vmatprep.subr.bf16.mxu0 0
    %459 = vmatpush1.bf16.msra.mxu0 %v431
    %460 = vmatprep.subr.bf16.mxu0 0
    %461 = vmatpush1.bf16.msra.mxu0 %v430
    %462 = vmatprep.subr.bf16.mxu0 0
    %463 = vmatpush2.bf16.msra.mxu0 0
    %464 = vmatprep.subr.bf16.mxu0 0
    %465 = vmatpush2.bf16.msra.mxu0 0
    %466 = vmatprep.subr.bf16.mxu0 0
    %467 = vmatpush2.bf16.msra.mxu0 0
    %468 = vmatprep.subr.bf16.mxu0 0
    %469 = vmatpush2.bf16.msra.mxu0 0
    %470 = vmatprep.subr.bf16.mxu0 0
    %471 = vmatpush2.bf16.msra.mxu0 0
    %472 = vmatprep.subr.bf16.mxu0 0
    %473 = vmatpush2.bf16.msra.mxu0 0
    %474 = vmatprep.subr.bf16.mxu0 0
    %475 = vmatpush2.bf16.msra.mxu0 0
    %476 = vmatprep.subr.bf16.mxu0 0
    %477 = vmatpush2.bf16.msra.mxu0 0
    %478 = vmatprep.mubr.bf16.mxu0 0
    %479 = vmatmul.mubr.bf16.gmra.mxu0 %v374
    %v480 = vpop.f32.mrf.mxu0
    %v481 = vadd.f32 %v396, %v480
    %v482 = vpop.f32.mrf.mxu0
    %v483 = vpop.f32.mrf.mxu0
    %v484 = vpop.f32.mrf.mxu0
    %485 = vdwg.mxu0
    %vm486 = vcmp.gt.f32.partialorder %v481, 0.0
    %v487 = vmin.f32 %v481, 0.0
    %v488 = vmul.f32 %v487, 1.442695
    %v489 = vpow.pop %v488
    %v490 = vsub.f32 %v489, 1.0
    %v491 = vmul.f32 %v490, 1.6732632
    %v492 = vsel %vm486, %v481, %v491
    %v493 = vmul.f32 %v492, 1.050701
    %v494 = vpack.c.bf16 %v493, %v493
    %v495 = vld [vmem:[%s9] sm:$0xf]
    %v496 = vld [vmem:[%s9 + $0x4] sm:$0xf]
    %v497 = vld [vmem:[%s9 + $0x8] sm:$0xf]
    %v498 = vld [vmem:[%s9 + $0xc] sm:$0xf]
    %v499 = vld [vmem:[%s9 + $0x10] sm:$0xf]
    %v500 = vld [vmem:[%s9 + $0x14] sm:$0xf]
    %v501 = vld [vmem:[%s9 + $0x18] sm:$0xf]
    %v502 = vld [vmem:[%s9 + $0x1c] sm:$0xf]
    %v503 = vld [vmem:[%s9 + $0x20] sm:$0xf]
    %v504 = vld [vmem:[%s9 + $0x24] sm:$0xf]
    %v505 = vld [vmem:[%s9 + $0x28] sm:$0xf]
    %v506 = vld [vmem:[%s9 + $0x2c] sm:$0xf]
    %v507 = vld [vmem:[%s9 + $0x30] sm:$0xf]
    %v508 = vld [vmem:[%s9 + $0x34] sm:$0xf]
    %v509 = vld [vmem:[%s9 + $0x38] sm:$0xf]
    %v510 = vld [vmem:[%s9 + $0x3c] sm:$0xf]
    %v511 = vld [vmem:[%s10] sm:$0x1]
    %v513 = vlaneseq
    %v514 = vshrl.u32 %v513, 7
    %v515 = vsub.s32 0, %v514
    %v516 = vrot.slane %v511, %v515
    %v534 = vunpack.c.l.b16 %v495
    %v535 = vunpack.c.l.b16 %v496
    %v536 = vunpack.c.l.b16 %v497
    %v537 = vunpack.c.l.b16 %v498
    %v538 = vunpack.c.l.b16 %v499
    %v539 = vunpack.c.l.b16 %v500
    %v540 = vunpack.c.l.b16 %v501
    %v541 = vunpack.c.l.b16 %v502
    %v542 = vunpack.c.l.b16 %v503
    %v543 = vunpack.c.l.b16 %v504
    %v544 = vunpack.c.l.b16 %v505
    %v545 = vunpack.c.l.b16 %v506
    %v546 = vunpack.c.l.b16 %v507
    %v547 = vunpack.c.l.b16 %v508
    %v548 = vunpack.c.l.b16 %v509
    %v549 = vunpack.c.l.b16 %v510
    %v550 = vpack.c.b16 %v535, %v534
    %v551 = vpack.c.b16 %v537, %v536
    %v552 = vpack.c.b16 %v539, %v538
    %v553 = vpack.c.b16 %v541, %v540
    %v554 = vpack.c.b16 %v543, %v542
    %v555 = vpack.c.b16 %v545, %v544
    %v556 = vpack.c.b16 %v547, %v546
    %v557 = vpack.c.b16 %v549, %v548
    %566 = vmatprep.subr.bf16.mxu0 0
    %567 = vmatpush1.bf16.msra.mxu0 %v557
    %568 = vmatprep.subr.bf16.mxu0 0
    %569 = vmatpush1.bf16.msra.mxu0 %v556
    %570 = vmatprep.subr.bf16.mxu0 0
    %571 = vmatpush1.bf16.msra.mxu0 %v555
    %572 = vmatprep.subr.bf16.mxu0 0
    %573 = vmatpush1.bf16.msra.mxu0 %v554
    %574 = vmatprep.subr.bf16.mxu0 0
    %575 = vmatpush1.bf16.msra.mxu0 %v553
    %576 = vmatprep.subr.bf16.mxu0 0
    %577 = vmatpush1.bf16.msra.mxu0 %v552
    %578 = vmatprep.subr.bf16.mxu0 0
    %579 = vmatpush1.bf16.msra.mxu0 %v551
    %580 = vmatprep.subr.bf16.mxu0 0
    %581 = vmatpush1.bf16.msra.mxu0 %v550
    %582 = vmatprep.subr.bf16.mxu0 0
    %583 = vmatpush2.bf16.msra.mxu0 0
    %584 = vmatprep.subr.bf16.mxu0 0
    %585 = vmatpush2.bf16.msra.mxu0 0
    %586 = vmatprep.subr.bf16.mxu0 0
    %587 = vmatpush2.bf16.msra.mxu0 0
    %588 = vmatprep.subr.bf16.mxu0 0
    %589 = vmatpush2.bf16.msra.mxu0 0
    %590 = vmatprep.subr.bf16.mxu0 0
    %591 = vmatpush2.bf16.msra.mxu0 0
    %592 = vmatprep.subr.bf16.mxu0 0
    %593 = vmatpush2.bf16.msra.mxu0 0
    %594 = vmatprep.subr.bf16.mxu0 0
    %595 = vmatpush2.bf16.msra.mxu0 0
    %596 = vmatprep.subr.bf16.mxu0 0
    %597 = vmatpush2.bf16.msra.mxu0 0
    %598 = vmatprep.mubr.bf16.mxu0 0
    %599 = vmatmul.mubr.bf16.gmra.mxu0 %v494
    %v600 = vpop.f32.mrf.mxu0
    %v601 = vadd.f32 %v516, %v600
    %v602 = vpop.f32.mrf.mxu0
    %v603 = vpop.f32.mrf.mxu0
    %v604 = vpop.f32.mrf.mxu0
    %605 = vdwg.mxu0
    %v606 = vtanh.pop %v601
    %v607 = vmul.f32 %v606, 0.5
    %v608 = vadd.f32 %v607, 0.5
    %vm609 = vcmask 523264
    %610 = vst.msk [vmem:[#allocation7] sm:$0xff] %vm609, %v608
    // Predicated region
    $region54: #{tpu_custom_call.1} parent=1 // pred_check
      _
    $region55: #{tpu_custom_call.1} parent=1 // pred_check_branch
      %612 = sbr.rel (0) target = $region57
    $region56: #{tpu_custom_call.1} parent=1 // pred_region
      %s614 = ssub.s32 128, 32
      %615 = vsyncadd [#allocation4], %s614
      %s616 = sshll.u32 [#allocation7], 4
      %s617 = int_to_ptr.vmem [resolvable:$true] %s616
      %622 = dma.vmem_to_hbm [thread:$0]  %s617, 32, %s11, [#allocation4], 32, 32, 2
    $region57: #{tpu_custom_call.1} parent=1 // pred_fallthru
      _
    // Predicated region
    $region58: #{tpu_custom_call.1} parent=1 // pred_check
      _
    $region59: #{tpu_custom_call.1} parent=1 // pred_check_branch
      %624 = sbr.rel (0) target = $region61
    $region60: #{tpu_custom_call.1} parent=1 // pred_region
      %625 = dma.done [#allocation4], 128
    $region61: #{tpu_custom_call.1} parent=1 // pred_fallthru
      _
    %626 = vsyncpa [#allocation3], 1
    %627 = vsyncpa [#allocation6], 1
    %628 = vsyncpa [#allocation4], 1

</llo_original>
